<compile_context>
chip_gen: v7x
topology: tpu7x:2x2x1
jax: 0.10.0
libtpu: 0.0.40
codegen_flags: <defaults>
</compile_context>

<pallas_src>
import functools

import jax
import jax.numpy as jnp
from jax import lax
from jax.experimental import pallas as pl
from jax.experimental.pallas import tpu as pltpu


def _make_kernel(h, num_rest, tile_n, strip_n, mm_dtype):
    """Kernel body for one (d_in, tile_n) batch tile, feature-major layout."""
    n_strips = tile_n // strip_n

    def kernel(*refs):
        if num_rest > 0:
            x_ref, win_ref, bin_ref, wstk_ref, bstk_ref, h_out_ref = refs
        else:
            x_ref, win_ref, bin_ref, h_out_ref = refs
            wstk_ref = bstk_ref = None

        # Small loop-invariant operands: load once per grid step.
        w_in = win_ref[...]                                 # (3h, d_in) mm_dtype
        b_in = bin_ref[...]                                 # (3h, 1)    f32
        w_rest = [wstk_ref[k] for k in range(num_rest)]     # (h, h)     mm_dtype
        b_rest = [bstk_ref[k] for k in range(num_rest)]     # (h, 1)     f32

        def strip(si, carry):
            s0 = pl.multiple_of(si * strip_n, strip_n)
            X = x_ref[:, pl.ds(s0, strip_n)].astype(mm_dtype)   # (d_in, strip_n)

            # Fused projection: rows [0:h) -> U, [h:2h) -> V, [2h:3h) -> Z of
            # the first hidden layer.  Bias column broadcasts over lanes.
            pre = jnp.dot(w_in, X, preferred_element_type=jnp.float32) + b_in
            U = jnp.tanh(pre[:h, :])
            V = jnp.tanh(pre[h:2 * h, :])
            Z = pre[2 * h:, :]

            D = U - V                                       # hoisted invariant
            H = V + Z * D                                   # == Z*U + (1-Z)*V

            for k in range(num_rest):                       # remaining hidden layers
                Z = jnp.dot(w_rest[k], H.astype(mm_dtype),
                            preferred_element_type=jnp.float32) + b_rest[k]
                H = V + Z * D

            h_out_ref[:, pl.ds(s0, strip_n)] = H            # lane-dense store
            return carry

        lax.fori_loop(0, n_strips, strip, None)

    return kernel


def init_params(key, layers):
    """Deterministic PyTorch-Linear-style init; weights in PyTorch (out, in) layout."""

    def linear(key, fan_in, fan_out):
        kw, kb = jax.random.split(key)
        bound = 1.0 / (fan_in ** 0.5)
        w = jax.random.uniform(kw, (fan_out, fan_in), jnp.float32, -bound, bound)
        b = jax.random.uniform(kb, (fan_out,), jnp.float32, -bound, bound)
        return w, b

    num_hidden = len(layers) - 2
    keys = jax.random.split(key, 2 + num_hidden)
    params = {
        "U": linear(keys[0], layers[0], layers[1]),
        "V": linear(keys[1], layers[0], layers[1]),
        "hidden": [linear(keys[2 + i], layers[i], layers[i + 1]) for i in range(num_hidden)],
    }
    # NOTE: the module's output_layer is dead code when hard_constraint_fn is
    # None (F is discarded), so it is intentionally not materialized.
    return params


def _pack_params(params, mm_dtype):
    """Fuse U/V/first-hidden into one weight; stack the remaining hidden layers."""
    wU, bU = params["U"]
    wV, bV = params["V"]
    hidden = params["hidden"]
    w0, b0 = hidden[0]
    w_in = jnp.concatenate([wU, wV, w0], axis=0).astype(mm_dtype)            # (3h, d_in)
    b_in = jnp.concatenate([bU, bV, b0], axis=0)[:, None].astype(jnp.float32)  # (3h, 1)
    rest = hidden[1:]
    if rest:
        w_stk = jnp.stack([w for w, _ in rest], axis=0).astype(mm_dtype)     # (L-1, h, h)
        b_stk = jnp.stack([b for _, b in rest], axis=0)[:, :, None].astype(jnp.float32)
    else:
        w_stk = b_stk = None
    return w_in, b_in, w_stk, b_stk


@functools.partial(jax.jit, static_argnames=("tile_n", "strip_n", "matmul_dtype"))
def improved_mlp_forward_t(x_t, params, tile_n=2048, strip_n=256,
                           matmul_dtype=jnp.bfloat16):
    """Feature-major forward: x_t is (d_in, N); returns H^T of shape (h, N)."""
    d_in, N = x_t.shape
    hidden = params["hidden"]
    num_hidden = len(hidden)
    assert num_hidden >= 1, "ImprovedMLP requires at least one hidden Linear"
    h = params["U"][0].shape[0]
    assert h % 8 == 0, "hidden width must be sublane-aligned (multiple of 8)"
    assert hidden[0][0].shape == (h, d_in)
    for w, _ in hidden[1:]:
        assert w.shape == (h, h), "non-uniform hidden widths not supported"
    assert strip_n % 128 == 0, "strip_n must be lane-aligned"
    assert tile_n % strip_n == 0, "tile_n must be a multiple of strip_n"

    # Shrink the DMA tile if the problem is smaller than the default tile.
    tile_n = min(tile_n, max(strip_n, pl.cdiv(N, strip_n) * strip_n))

    w_in, b_in, w_stk, b_stk = _pack_params(params, matmul_dtype)
    num_rest = num_hidden - 1

    grid = (pl.cdiv(N, tile_n),)   # tail-tile stores are masked by Pallas

    def whole(a):
        nd = a.ndim
        return pl.BlockSpec(a.shape, lambda i, _nd=nd: (0,) * _nd)

    in_specs = [pl.BlockSpec((d_in, tile_n), lambda i: (0, i)),
                whole(w_in), whole(b_in)]
    args = [x_t, w_in, b_in]
    if num_rest > 0:
        in_specs += [whole(w_stk), whole(b_stk)]
        args += [w_stk, b_stk]

    param_bytes = (w_in.size * w_in.dtype.itemsize + b_in.size * 4
                   + (0 if num_rest == 0
                      else w_stk.size * w_stk.dtype.itemsize + b_stk.size * 4))
    cost = pl.CostEstimate(
        flops=2 * N * h * (3 * d_in + num_rest * h) + 4 * N * h * num_hidden,
        transcendentals=2 * N * h,
        bytes_accessed=N * d_in * x_t.dtype.itemsize + 4 * N * h + param_bytes,
    )

    return pl.pallas_call(
        _make_kernel(h, num_rest, tile_n, strip_n, matmul_dtype),
        out_shape=jax.ShapeDtypeStruct((h, N), jnp.float32),
        grid=grid,
        in_specs=in_specs,
        out_specs=pl.BlockSpec((h, tile_n), lambda i: (0, i)),
        compiler_params=pltpu.CompilerParams(dimension_semantics=("parallel",)),
        cost_estimate=cost,
    )(*args)


def improved_mlp_forward(x, params, **kw):
    """Drop-in (N, d_in) -> (N, h) wrapper.  The two transposes are XLA layout
    plumbing that round-trip HBM; prefer improved_mlp_forward_t end-to-end."""
    return improved_mlp_forward_t(x.T, params, **kw).T


def _reference_forward(x, params):
    """Pure-JAX mirror of ImprovedMLP.forward (eval mode, no encoding/constraint)."""
    wU, bU = params["U"]
    wV, bV = params["V"]
    U = jnp.tanh(x @ wU.T + bU)
    V = jnp.tanh(x @ wV.T + bV)
    out = x
    for w, b in params["hidden"]:
        Z = out @ w.T + b
        H = Z * U + (1.0 - Z) * V
        out = H
    return out


if __name__ == "__main__":
    # layers = [in, hidden..., out]; tanh activation (typical PINN config).
    layers = [4, 32, 32, 32, 2]
    N, tile_n, strip_n = 2048, 512, 256   # grid of 4 tiles -> feeds both v7x TCs

    key = jax.random.PRNGKey(0)
    k_x, k_p = jax.random.split(key)
    x_t = jax.random.normal(k_x, (layers[0], N), dtype=jnp.float32)  # feature-major X^T
    params = init_params(k_p, layers)

    ref = _reference_forward(x_t.T, params)          # (N, h) pure-JAX reference

    # Exact f32 path (faithful to the f32 PyTorch module), tight tolerance.
    out_f32 = jax.block_until_ready(
        improved_mlp_forward_t(x_t, params, tile_n=tile_n, strip_n=strip_n,
                               matmul_dtype=jnp.float32))
    assert out_f32.shape == (layers[1], N), out_f32.shape
    assert jnp.allclose(out_f32.T, ref, atol=1e-5, rtol=1e-4), "f32 mismatch vs reference"

    # Default bf16-matmul / f32-accumulate path (recommended on v5e/v6e/v7x).
    out_bf16 = jax.block_until_ready(
        improved_mlp_forward_t(x_t, params, tile_n=tile_n, strip_n=strip_n))
    assert jnp.allclose(out_bf16.T, ref, atol=5e-2, rtol=5e-2), "bf16 mismatch vs reference"

    # Row-major drop-in wrapper (layout plumbing only).
    out_rm = jax.block_until_ready(
        improved_mlp_forward(x_t.T, params, tile_n=tile_n, strip_n=strip_n,
                             matmul_dtype=jnp.float32))
    assert jnp.allclose(out_rm, ref, atol=1e-5, rtol=1e-4), "row-major wrapper mismatch"

    print("KERNEL_OK")
</pallas_src>

<mosaic_0001>
module attributes {stable_mosaic.version = 11 : i64} {
  func.func @kernel(%arg0: i32, %arg1: memref<4x512xf32, #tpu.memory_space<vmem>>, %arg2: memref<96x4xf32, #tpu.memory_space<vmem>>, %arg3: memref<96x1xf32, #tpu.memory_space<vmem>>, %arg4: memref<2x32x32xf32, #tpu.memory_space<vmem>>, %arg5: memref<2x32x1xf32, #tpu.memory_space<vmem>>, %arg6: memref<32x512xf32, #tpu.memory_space<vmem>>) attributes {dimension_semantics = [#tpu.dimension_semantics<parallel>], iteration_bounds = array<i64: 4>, scalar_prefetch = 0 : i64, scratch_operands = 0 : i64, tpu.core_type = #tpu.core_type<tc>, window_params = [{transform_indices = @transform_0, window_bounds = array<i64: 4, 512>}, {pipeline_mode = #tpu.pipeline_mode<synchronous>, transform_indices = @transform_1, window_bounds = array<i64: 96, 4>}, {pipeline_mode = #tpu.pipeline_mode<synchronous>, transform_indices = @transform_2, window_bounds = array<i64: 96, 1>}, {pipeline_mode = #tpu.pipeline_mode<synchronous>, transform_indices = @transform_3, window_bounds = array<i64: 2, 32, 32>}, {pipeline_mode = #tpu.pipeline_mode<synchronous>, transform_indices = @transform_4, window_bounds = array<i64: 2, 32, 1>}, {transform_indices = @transform_5, window_bounds = array<i64: 32, 512>}]} {
    %c0 = arith.constant 0 : index
    %c0_0 = arith.constant 0 : index
    %0 = vector.load %arg2[%c0, %c0_0] : memref<96x4xf32, #tpu.memory_space<vmem>>, vector<96x4xf32>
    %c0_1 = arith.constant 0 : index
    %c0_2 = arith.constant 0 : index
    %1 = vector.load %arg3[%c0_1, %c0_2] : memref<96x1xf32, #tpu.memory_space<vmem>>, vector<96x1xf32>
    %c0_3 = arith.constant 0 : index
    %c0_4 = arith.constant 0 : index
    %c0_5 = arith.constant 0 : index
    %2 = vector.load %arg4[%c0_3, %c0_4, %c0_5] : memref<2x32x32xf32, #tpu.memory_space<vmem>>, vector<1x32x32xf32>
    %3 = vector.shape_cast %2 : vector<1x32x32xf32> to vector<32x32xf32>
    %c1 = arith.constant 1 : index
    %c0_6 = arith.constant 0 : index
    %c0_7 = arith.constant 0 : index
    %4 = vector.load %arg4[%c1, %c0_6, %c0_7] : memref<2x32x32xf32, #tpu.memory_space<vmem>>, vector<1x32x32xf32>
    %5 = vector.shape_cast %4 : vector<1x32x32xf32> to vector<32x32xf32>
    %c0_8 = arith.constant 0 : index
    %c0_9 = arith.constant 0 : index
    %c0_10 = arith.constant 0 : index
    %6 = vector.load %arg5[%c0_8, %c0_9, %c0_10] : memref<2x32x1xf32, #tpu.memory_space<vmem>>, vector<1x32x1xf32>
    %7 = vector.shape_cast %6 : vector<1x32x1xf32> to vector<32x1xf32>
    %c1_11 = arith.constant 1 : index
    %c0_12 = arith.constant 0 : index
    %c0_13 = arith.constant 0 : index
    %8 = vector.load %arg5[%c1_11, %c0_12, %c0_13] : memref<2x32x1xf32, #tpu.memory_space<vmem>>, vector<1x32x1xf32>
    %9 = vector.shape_cast %8 : vector<1x32x1xf32> to vector<32x1xf32>
    %c0_i32 = arith.constant 0 : i32
    %c2_i32 = arith.constant 2 : i32
    %10 = arith.addi %c0_i32, %c2_i32 : i32
    %c1_i32 = arith.constant 1 : i32
    scf.for %arg7 = %c0_i32 to %10 step %c1_i32  : i32 {
      %c256_i32 = arith.constant 256 : i32
      %11 = arith.muli %arg7, %c256_i32 : i32
      %12 = tpu.assume_multiple %11, 256 : i32
      %c0_15 = arith.constant 0 : index
      %13 = arith.index_cast %12 : i32 to index
      %14 = vector.load %arg1[%c0_15, %13] : memref<4x512xf32, #tpu.memory_space<vmem>>, vector<4x256xf32>
      %cst = arith.constant dense<0.000000e+00> : vector<96x256xf32>
      %15 = tpu.matmul %0, %14, %cst {dimension_numbers = #tpu.dot_dimension_numbers<[1], [0], [0], [1], [0, 0, 1, 1], [], []>} : vector<96x4xf32>, vector<4x256xf32>, vector<96x256xf32> -> vector<96x256xf32>
      %16 = vector.broadcast %1 : vector<96x1xf32> to vector<96x256xf32>
      %17 = arith.addf %15, %16 : vector<96x256xf32>
      %18 = vector.extract_strided_slice %17 {offsets = [0, 0], sizes = [32, 256], strides = [1, 1]} : vector<96x256xf32> to vector<32x256xf32>
      %19 = math.tanh %18 : vector<32x256xf32>
      %20 = vector.extract_strided_slice %17 {offsets = [32, 0], sizes = [32, 256], strides = [1, 1]} : vector<96x256xf32> to vector<32x256xf32>
      %21 = math.tanh %20 : vector<32x256xf32>
      %22 = vector.extract_strided_slice %17 {offsets = [64, 0], sizes = [32, 256], strides = [1, 1]} : vector<96x256xf32> to vector<32x256xf32>
      %23 = arith.subf %19, %21 : vector<32x256xf32>
      %24 = arith.mulf %22, %23 : vector<32x256xf32>
      %25 = arith.addf %21, %24 : vector<32x256xf32>
      %cst_16 = arith.constant dense<0.000000e+00> : vector<32x256xf32>
      %26 = tpu.matmul %3, %25, %cst_16 {dimension_numbers = #tpu.dot_dimension_numbers<[1], [0], [0], [1], [0, 0, 1, 1], [], []>} : vector<32x32xf32>, vector<32x256xf32>, vector<32x256xf32> -> vector<32x256xf32>
      %27 = vector.broadcast %7 : vector<32x1xf32> to vector<32x256xf32>
      %28 = arith.addf %26, %27 : vector<32x256xf32>
      %29 = arith.mulf %28, %23 : vector<32x256xf32>
      %30 = arith.addf %21, %29 : vector<32x256xf32>
      %cst_17 = arith.constant dense<0.000000e+00> : vector<32x256xf32>
      %31 = tpu.matmul %5, %30, %cst_17 {dimension_numbers = #tpu.dot_dimension_numbers<[1], [0], [0], [1], [0, 0, 1, 1], [], []>} : vector<32x32xf32>, vector<32x256xf32>, vector<32x256xf32> -> vector<32x256xf32>
      %32 = vector.broadcast %9 : vector<32x1xf32> to vector<32x256xf32>
      %33 = arith.addf %31, %32 : vector<32x256xf32>
      %34 = arith.mulf %33, %23 : vector<32x256xf32>
      %35 = arith.addf %21, %34 : vector<32x256xf32>
      %c0_18 = arith.constant 0 : index
      %36 = arith.index_cast %12 : i32 to index
      %37 = vector.load %arg6[%c0_18, %36] : memref<32x512xf32, #tpu.memory_space<vmem>>, vector<32x256xf32>
      tpu.vector_store %arg6[%c0_18, %36], %35 {strides = array<i32>} : memref<32x512xf32, #tpu.memory_space<vmem>>, vector<32x256xf32>,
    }
    %c2_i32_14 = arith.constant 2 : i32
    return
  }
  func.func @transform_0(%arg0: i32) -> (i32, i32) {
    %c0_i32 = arith.constant 0 : i32
    %c0_i32_0 = arith.constant 0 : i32
    return %c0_i32, %arg0 : i32, i32
  }
  func.func @transform_1(%arg0: i32) -> (i32, i32) {
    %c0_i32 = arith.constant 0 : i32
    %c0_i32_0 = arith.constant 0 : i32
    %c0_i32_1 = arith.constant 0 : i32
    return %c0_i32, %c0_i32_0 : i32, i32
  }
  func.func @transform_2(%arg0: i32) -> (i32, i32) {
    %c0_i32 = arith.constant 0 : i32
    %c0_i32_0 = arith.constant 0 : i32
    %c0_i32_1 = arith.constant 0 : i32
    return %c0_i32, %c0_i32_0 : i32, i32
  }
  func.func @transform_3(%arg0: i32) -> (i32, i32, i32) {
    %c0_i32 = arith.constant 0 : i32
    %c0_i32_0 = arith.constant 0 : i32
    %c0_i32_1 = arith.constant 0 : i32
    %c0_i32_2 = arith.constant 0 : i32
    return %c0_i32, %c0_i32_0, %c0_i32_1 : i32, i32, i32
  }
  func.func @transform_4(%arg0: i32) -> (i32, i32, i32) {
    %c0_i32 = arith.constant 0 : i32
    %c0_i32_0 = arith.constant 0 : i32
    %c0_i32_1 = arith.constant 0 : i32
    %c0_i32_2 = arith.constant 0 : i32
    return %c0_i32, %c0_i32_0, %c0_i32_1 : i32, i32, i32
  }
  func.func @transform_5(%arg0: i32) -> (i32, i32) {
    %c0_i32 = arith.constant 0 : i32
    %c0_i32_0 = arith.constant 0 : i32
    return %c0_i32, %arg0 : i32, i32
  }
}

</mosaic_0001>

<llo_original>
// kernel: improved_mlp_forward_t.1
$region0: #{improved_mlp_forward_t.1}
  #allocation0 [shape = 'u32[]', space=smem, size = 0x4, offset = 0x4, fixed_abs, tag = 'smem constant byte address 0x4 - core index']
  #allocation1 [shape = 'u32[144,128]{1,0:T(1,128)}', space=vmem, size = 0x12000, scoped, tag = 'internal scratch']
  %s0 = inlined_call_operand.vmem [shape: f32[4,2048], index: 0, kind: input, shape index: {}]
  %s1 = inlined_call_operand.vmem [shape: f32[96,4], index: 1, kind: input, shape index: {}]
  %s2 = inlined_call_operand.vmem [shape: f32[96,1], index: 2, kind: input, shape index: {}]
  %s3 = inlined_call_operand.vmem [shape: f32[2,32,32], index: 3, kind: input, shape index: {}]
  %s4 = inlined_call_operand.vmem [shape: f32[2,32,1], index: 4, kind: input, shape index: {}]
  %s5 = inlined_call_operand.hbm [shape: f32[32,2048], index: 5, kind: output, shape index: {}]
  %s6 = sld [smem:[#allocation0]]
  $region60: #{improved_mlp_forward_t.1} parent=0
    _
  %s8 = ssub.s32 1, %s6
  %s9 = scalar_select 0, %s8, %s6
  $region1: #{improved_mlp_forward_t.1} parent=0
    #allocation2 [shape = 'u8[131072]{0}', space=vmem, size = 0x20000, scoped, tag = 'output window, operand 0']
    #allocation3 [shape = 's32[2]{0}', space=sflag, size = 0x8, scoped, tag = 'scoped memory for improved_mlp_forward_t.1']
    %10 = vsyncpa [#allocation3], 0
    %s11 = scalar_lea.sflag [#allocation3], 1
    %12 = vsyncpa %s11, 0
    loop: start=0, step=1, limit=6
    $region2: #{improved_mlp_forward_t.1} parent=1 // loop_pre_header
      _
    $region3: #{improved_mlp_forward_t.1} parent=1 // loop_header
      %s14 = sphi 0, %s18
      %p15 = scmp.ge.s32.totalorder %s14, 6
      %s24 = sphi 0, %s26
      %s27 = sphi 0, %s24
      %s28 = sphi 0, %s27
      %s44 = sphi 0, %s28
      %s48 = sphi 0, %s48
      %s50 = sphi 0, %s48
      %s51 = sphi 0, %s50
      %s65 = sphi 0, %s51
      %s69 = sphi 0, %s69
      %s71 = sphi 0, %s69
      %s72 = sphi 0, %s71
      %s86 = sphi 0, %s72
      %s90 = sphi 0, %s90
      %s92 = sphi 0, %s90
      %s93 = sphi 0, %s92
      %s107 = sphi 0, %s93
      %s111 = sphi 0, %s111
      %s113 = sphi 0, %s111
      %s114 = sphi 0, %s113
      %s128 = sphi 0, %s114
      %s134 = sphi 0, %s136
      %s137 = sphi 0, %s134
      %s138 = sphi 0, %s137
      %s154 = sphi 0, %s138
    $region4: #{improved_mlp_forward_t.1} parent=1 // loop_header_branch
      %17 = sbr.rel (%p15) target = $region8
    $region5: #{improved_mlp_forward_t.1} parent=1 // loop_body
      %s19 = ssub.s32 %s14, 1
      %s20 = ssub.s32 %s14, 2
      %s21 = sadd.s32 %s14, 1
      %s22 = ssub.s32 %s14, %s21
      %p23 = scmp.eq.s32.totalorder %s22, 0
      %s25 = sadd.s32 %s24, 1
      %s26 = scalar_select %p23, %s24, %s25
      %p29 = pneg %p23
      %p30 = scmp.eq.s32.totalorder %s14, 3
      %p31 = por %p29, %p30
      %p32 = scmp.ne.s32.totalorder %s24, %s27
      %p33 = scmp.eq.s32.totalorder %s14, 0
      %p34 = por %p32, %p33
      %p35 = scmp.ne.s32.totalorder %s24, %s27
      %p36 = scmp.eq.s32.totalorder %s19, 3
      %p37 = por %p35, %p36
      %p38 = scmp.ne.s32.totalorder %s27, %s28
      %p39 = scmp.eq.s32.totalorder %s19, 0
      %p40 = por %p38, %p39
      %p41 = scmp.ne.s32.totalorder %s27, %s28
      %p42 = scmp.eq.s32.totalorder %s20, 3
      %p43 = por %p41, %p42
      %p45 = scmp.ne.s32.totalorder %s28, %s44
      %p46 = scmp.eq.s32.totalorder %s20, 0
      %p47 = por %p45, %p46
      %s49 = sadd.s32 %s48, 1
      %p52 = scmp.eq.s32.totalorder %s14, 3
      %p53 = scmp.ne.s32.totalorder %s48, %s50
      %p54 = scmp.eq.s32.totalorder %s14, 0
      %p55 = por %p53, %p54
      %p56 = scmp.ne.s32.totalorder %s48, %s50
      %p57 = scmp.eq.s32.totalorder %s19, 3
      %p58 = por %p56, %p57
      %p59 = scmp.ne.s32.totalorder %s50, %s51
      %p60 = scmp.eq.s32.totalorder %s19, 0
      %p61 = por %p59, %p60
      %p62 = scmp.ne.s32.totalorder %s50, %s51
      %p63 = scmp.eq.s32.totalorder %s20, 3
      %p64 = por %p62, %p63
      %p66 = scmp.ne.s32.totalorder %s51, %s65
      %p67 = scmp.eq.s32.totalorder %s20, 0
      %p68 = por %p66, %p67
      %s70 = sadd.s32 %s69, 1
      %p73 = scmp.eq.s32.totalorder %s14, 3
      %p74 = scmp.ne.s32.totalorder %s69, %s71
      %p75 = scmp.eq.s32.totalorder %s14, 0
      %p76 = por %p74, %p75
      %p77 = scmp.ne.s32.totalorder %s69, %s71
      %p78 = scmp.eq.s32.totalorder %s19, 3
      %p79 = por %p77, %p78
      %p80 = scmp.ne.s32.totalorder %s71, %s72
      %p81 = scmp.eq.s32.totalorder %s19, 0
      %p82 = por %p80, %p81
      %p83 = scmp.ne.s32.totalorder %s71, %s72
      %p84 = scmp.eq.s32.totalorder %s20, 3
      %p85 = por %p83, %p84
      %p87 = scmp.ne.s32.totalorder %s72, %s86
      %p88 = scmp.eq.s32.totalorder %s20, 0
      %p89 = por %p87, %p88
      %s91 = sadd.s32 %s90, 1
      %p94 = scmp.eq.s32.totalorder %s14, 3
      %p95 = scmp.ne.s32.totalorder %s90, %s92
      %p96 = scmp.eq.s32.totalorder %s14, 0
      %p97 = por %p95, %p96
      %p98 = scmp.ne.s32.totalorder %s90, %s92
      %p99 = scmp.eq.s32.totalorder %s19, 3
      %p100 = por %p98, %p99
      %p101 = scmp.ne.s32.totalorder %s92, %s93
      %p102 = scmp.eq.s32.totalorder %s19, 0
      %p103 = por %p101, %p102
      %p104 = scmp.ne.s32.totalorder %s92, %s93
      %p105 = scmp.eq.s32.totalorder %s20, 3
      %p106 = por %p104, %p105
      %p108 = scmp.ne.s32.totalorder %s93, %s107
      %p109 = scmp.eq.s32.totalorder %s20, 0
      %p110 = por %p108, %p109
      %s112 = sadd.s32 %s111, 1
      %p115 = scmp.eq.s32.totalorder %s14, 3
      %p116 = scmp.ne.s32.totalorder %s111, %s113
      %p117 = scmp.eq.s32.totalorder %s14, 0
      %p118 = por %p116, %p117
      %p119 = scmp.ne.s32.totalorder %s111, %s113
      %p120 = scmp.eq.s32.totalorder %s19, 3
      %p121 = por %p119, %p120
      %p122 = scmp.ne.s32.totalorder %s113, %s114
      %p123 = scmp.eq.s32.totalorder %s19, 0
      %p124 = por %p122, %p123
      %p125 = scmp.ne.s32.totalorder %s113, %s114
      %p126 = scmp.eq.s32.totalorder %s20, 3
      %p127 = por %p125, %p126
      %p129 = scmp.ne.s32.totalorder %s114, %s128
      %p130 = scmp.eq.s32.totalorder %s20, 0
      %p131 = por %p129, %p130
      %s132 = ssub.s32 %s14, %s21
      %p133 = scmp.eq.s32.totalorder %s132, 0
      %s135 = sadd.s32 %s134, 1
      %s136 = scalar_select %p133, %s134, %s135
      %p139 = pneg %p133
      %p140 = scmp.eq.s32.totalorder %s14, 3
      %p141 = por %p139, %p140
      %p142 = scmp.ne.s32.totalorder %s134, %s137
      %p143 = scmp.eq.s32.totalorder %s14, 0
      %p144 = por %p142, %p143
      %p145 = scmp.ne.s32.totalorder %s134, %s137
      %p146 = scmp.eq.s32.totalorder %s19, 3
      %p147 = por %p145, %p146
      %p148 = scmp.ne.s32.totalorder %s137, %s138
      %p149 = scmp.eq.s32.totalorder %s19, 0
      %p150 = por %p148, %p149
      %p151 = scmp.ne.s32.totalorder %s137, %s138
      %p152 = scmp.eq.s32.totalorder %s20, 3
      %p153 = por %p151, %p152
      %p155 = scmp.ne.s32.totalorder %s138, %s154
      %p156 = scmp.eq.s32.totalorder %s20, 0
      %p157 = por %p155, %p156
      %p158 = scmp.le.s32.totalorder 1, %s14
      %p159 = scmp.lt.s32.totalorder %s14, 5
      %p160 = pnand %p158, %p159
      %p161 = pneg %p160
      // Predicated region
      $region9: #{improved_mlp_forward_t.1} parent=5 // pred_check
        _
      $region10: #{improved_mlp_forward_t.1} parent=5 // pred_check_branch
        %163 = sbr.rel (%p160) target = $region12
      $region11: #{improved_mlp_forward_t.1} parent=5 // pred_region
        %s164 = ssub.s32 %s14, 1
        // Predicated region
        $region13: #{improved_mlp_forward_t.1} parent=11 // pred_check
          %p165 = pneg %p61
        $region14: #{improved_mlp_forward_t.1} parent=11 // pred_check_branch
          %167 = sbr.rel (%p165) target = $region16
        $region15: #{improved_mlp_forward_t.1} parent=11 // pred_region
          _
        $region16: #{improved_mlp_forward_t.1} parent=11 // pred_fallthru
          _
        // Predicated region
        $region17: #{improved_mlp_forward_t.1} parent=11 // pred_check
          %p168 = pneg %p82
        $region18: #{improved_mlp_forward_t.1} parent=11 // pred_check_branch
          %170 = sbr.rel (%p168) target = $region20
        $region19: #{improved_mlp_forward_t.1} parent=11 // pred_region
          _
        $region20: #{improved_mlp_forward_t.1} parent=11 // pred_fallthru
          _
        // Predicated region
        $region21: #{improved_mlp_forward_t.1} parent=11 // pred_check
          %p171 = pneg %p103
        $region22: #{improved_mlp_forward_t.1} parent=11 // pred_check_branch
          %173 = sbr.rel (%p171) target = $region24
        $region23: #{improved_mlp_forward_t.1} parent=11 // pred_region
          _
        $region24: #{improved_mlp_forward_t.1} parent=11 // pred_fallthru
          _
        // Predicated region
        $region25: #{improved_mlp_forward_t.1} parent=11 // pred_check
          %p174 = pneg %p124
        $region26: #{improved_mlp_forward_t.1} parent=11 // pred_check_branch
          %176 = sbr.rel (%p174) target = $region28
        $region27: #{improved_mlp_forward_t.1} parent=11 // pred_region
          _
        $region28: #{improved_mlp_forward_t.1} parent=11 // pred_fallthru
          _
      $region12: #{improved_mlp_forward_t.1} parent=5 // pred_fallthru
        _
      %p177 = scmp.lt.s32.totalorder %s14, 4
      // Predicated region
      $region29: #{improved_mlp_forward_t.1} parent=5 // pred_check
        %p178 = pneg %p177
      $region30: #{improved_mlp_forward_t.1} parent=5 // pred_check_branch
        %180 = sbr.rel (%p178) target = $region32
      $region31: #{improved_mlp_forward_t.1} parent=5 // pred_region
        // Predicated region
        $region33: #{improved_mlp_forward_t.1} parent=31 // pred_check
          %p181 = pneg %p34
        $region34: #{improved_mlp_forward_t.1} parent=31 // pred_check_branch
          %183 = sbr.rel (%p181) target = $region36
        $region35: #{improved_mlp_forward_t.1} parent=31 // pred_region
          %s184 = smul.u32 4, %s14
          %p185 = scmp.lt.s32.totalorder %s184, 15
          %s186 = scalar_select %p185, %s184, 15
          %s187 = smul.addr %s186, 4
          %s188 = scalar_lea.vmem %s0, %s187
          %s189 = smul.u32 4, %s14
        $region36: #{improved_mlp_forward_t.1} parent=31 // pred_fallthru
          _
      $region32: #{improved_mlp_forward_t.1} parent=5 // pred_fallthru
        _
      %p190 = scmp.le.s32.totalorder 1, %s14
      %p191 = scmp.lt.s32.totalorder %s14, 5
      %p192 = pnand %p190, %p191
      %p193 = pneg %p192
      // Predicated region
      $region37: #{improved_mlp_forward_t.1} parent=5 // pred_check
        _
      $region38: #{improved_mlp_forward_t.1} parent=5 // pred_check_branch
        %195 = sbr.rel (%p192) target = $region40
      $region39: #{improved_mlp_forward_t.1} parent=5 // pred_region
        %s196 = ssub.s32 %s14, 1
        %s197 = smul.u32 4, %s19
        %p198 = scmp.lt.s32.totalorder %s197, 15
        %s199 = scalar_select %p198, %s197, 15
        %s200 = smul.addr %s199, 4
        %s201 = scalar_lea.vmem %s0, %s200
        %p202 = pneg %p40
        %p203 = pneg %p37
        %p204 = pneg %p61
        %p205 = pneg %p58
        %p206 = pneg %p82
        %p207 = pneg %p79
        %p208 = pneg %p103
        %p209 = pneg %p100
        %p210 = pneg %p124
        %p211 = pneg %p121
        %p212 = pneg %p150
        %p213 = pneg %p147
        %s214 = sand.u32 %s137, 1
        %s215 = scalar_lea.sflag [#allocation3], %s214
        %s216 = sand.u32 %s137, 1
        %s217 = smul.addr %s216, 128
        %s218 = scalar_lea.vmem [#allocation2], %s217
        %s219 = smul.u32 4, %s19
        %p220 = scmp.lt.s32.totalorder %s219, 15
        %s221 = scalar_select %p220, %s219, 15
        %s222 = smul.addr %s221, 4
        %s223 = scalar_lea.vmem %s0, %s222
        %s224 = smul.u32 4, %s19
        %s225 = smul.u32 4, %s19
        %v226 = vld [vmem:[%s1] sm:$0xff]
        %v227 = vld [vmem:[%s1 + $0x8] sm:$0xff]
        %v228 = vld [vmem:[%s1 + $0x10] sm:$0xff]
        %v229 = vld [vmem:[%s1 + $0x18] sm:$0xff]
        %v230 = vld [vmem:[%s1 + $0x20] sm:$0xff]
        %v231 = vld [vmem:[%s1 + $0x28] sm:$0xff]
        %v232 = vld [vmem:[%s1 + $0x30] sm:$0xff]
        %v233 = vld [vmem:[%s1 + $0x38] sm:$0xff]
        %v234 = vld [vmem:[%s1 + $0x40] sm:$0xff]
        %v235 = vld [vmem:[%s1 + $0x48] sm:$0xff]
        %v236 = vld [vmem:[%s1 + $0x50] sm:$0xff]
        %v237 = vld [vmem:[%s1 + $0x58] sm:$0xff]
        %v238 = vld [vmem:[%s2] sm:$0xff]
        %v239 = vld [vmem:[%s2 + $0x8] sm:$0xff]
        %v240 = vld [vmem:[%s2 + $0x10] sm:$0xff]
        %v241 = vld [vmem:[%s2 + $0x18] sm:$0xff]
        %v242 = vld [vmem:[%s2 + $0x20] sm:$0xff]
        %v243 = vld [vmem:[%s2 + $0x28] sm:$0xff]
        %v244 = vld [vmem:[%s2 + $0x30] sm:$0xff]
        %v245 = vld [vmem:[%s2 + $0x38] sm:$0xff]
        %v246 = vld [vmem:[%s2 + $0x40] sm:$0xff]
        %v247 = vld [vmem:[%s2 + $0x48] sm:$0xff]
        %v248 = vld [vmem:[%s2 + $0x50] sm:$0xff]
        %v249 = vld [vmem:[%s2 + $0x58] sm:$0xff]
        %v250 = vld [vmem:[%s3] sm:$0xff]
        %v251 = vld [vmem:[%s3 + $0x8] sm:$0xff]
        %v252 = vld [vmem:[%s3 + $0x10] sm:$0xff]
        %v253 = vld [vmem:[%s3 + $0x18] sm:$0xff]
        %s254 = scalar_lea.vmem %s3, 32
        %v255 = vld [vmem:[%s254] sm:$0xff]
        %v256 = vld [vmem:[%s254 + $0x8] sm:$0xff]
        %v257 = vld [vmem:[%s254 + $0x10] sm:$0xff]
        %v258 = vld [vmem:[%s254 + $0x18] sm:$0xff]
        %v259 = vld [vmem:[%s4] sm:$0xff]
        %v260 = vld [vmem:[%s4 + $0x8] sm:$0xff]
        %v261 = vld [vmem:[%s4 + $0x10] sm:$0xff]
        %v262 = vld [vmem:[%s4 + $0x18] sm:$0xff]
        %s263 = scalar_lea.vmem %s4, 32
        %v264 = vld [vmem:[%s263] sm:$0xff]
        %v265 = vld [vmem:[%s263 + $0x8] sm:$0xff]
        %v266 = vld [vmem:[%s263 + $0x10] sm:$0xff]
        %v267 = vld [vmem:[%s263 + $0x18] sm:$0xff]
        loop: start=0, step=1, limit=2
        $region41: #{improved_mlp_forward_t.1} parent=39 // loop_pre_header
          _
        $region42: #{improved_mlp_forward_t.1} parent=39 // loop_header
          %s269 = sphi 0, %s273
          %p270 = scmp.ge.s32.totalorder %s269, 2
        $region43: #{improved_mlp_forward_t.1} parent=39 // loop_header_branch
          %272 = sbr.rel (%p270) target = $region47
        $region44: #{improved_mlp_forward_t.1} parent=39 // loop_body
          %s274 = smul.u32 %s269, 256
          %s275 = sshra.s32 %s274, 7
          %s276 = sand.u32 %s274, 127
          %s277 = smul.addr %s275, 4
          %s278 = scalar_lea.vmem %s223, %s277
          %v279 = vld [vmem:[%s278] sm:$0xff]
          %281 = vset.pattern.permute.xlu0 0
          %282 = vperm.xlu0 %281, %v238
          %v283 = vpop.permute.xlu0 %282
          %286 = vset.pattern.permute.xlu0 0
          %287 = vperm.xlu0 %286, %v239
          %v288 = vpop.permute.xlu0 %287
          %291 = vset.pattern.permute.xlu0 0
          %292 = vperm.xlu0 %291, %v240
          %v293 = vpop.permute.xlu0 %292
          %296 = vset.pattern.permute.xlu0 0
          %297 = vperm.xlu0 %296, %v241
          %v298 = vpop.permute.xlu0 %297
          %301 = vset.pattern.permute.xlu0 0
          %302 = vperm.xlu0 %301, %v242
          %v303 = vpop.permute.xlu0 %302
          %306 = vset.pattern.permute.xlu0 0
          %307 = vperm.xlu0 %306, %v243
          %v308 = vpop.permute.xlu0 %307
          %311 = vset.pattern.permute.xlu0 0
          %312 = vperm.xlu0 %311, %v244
          %v313 = vpop.permute.xlu0 %312
          %316 = vset.pattern.permute.xlu0 0
          %317 = vperm.xlu0 %316, %v245
          %v318 = vpop.permute.xlu0 %317
          %321 = vset.pattern.permute.xlu0 0
          %322 = vperm.xlu0 %321, %v246
          %v323 = vpop.permute.xlu0 %322
          %326 = vset.pattern.permute.xlu0 0
          %327 = vperm.xlu0 %326, %v247
          %v328 = vpop.permute.xlu0 %327
          %331 = vset.pattern.permute.xlu0 0
          %332 = vperm.xlu0 %331, %v248
          %v333 = vpop.permute.xlu0 %332
          %336 = vset.pattern.permute.xlu0 0
          %337 = vperm.xlu0 %336, %v249
          %v338 = vpop.permute.xlu0 %337
          %v341 = vcombine.high %v279, %v279
          %vm342 = vcmask 31744
          %v344 = vsel %vm342, %v226, 0
          %v347 = vsel %vm342, %v227, 0
          %v350 = vsel %vm342, %v228, 0
          %v353 = vsel %vm342, %v229, 0
          %v356 = vsel %vm342, %v230, 0
          %v359 = vsel %vm342, %v231, 0
          %v362 = vsel %vm342, %v232, 0
          %v365 = vsel %vm342, %v233, 0
          %v368 = vsel %vm342, %v234, 0
          %v371 = vsel %vm342, %v235, 0
          %v374 = vsel %vm342, %v236, 0
          %v377 = vsel %vm342, %v237, 0
          %vm379 = vcmask 1043456
          %v380 = vsel %vm379, %v279, 0
          %v382 = vsel %vm379, %v341, 0
          %384 = vmatprep.subr.mxu0 %v382
          %385 = vmatpush1.msra.mxu0 %v380
          %386 = vmatprep.subr.mxu0 0.0
          %387 = vmatpush1.msra.mxu0 0.0
          %388 = vmatprep.subr.mxu0 0.0
          %389 = vmatpush1.msra.mxu0 0.0
          %390 = vmatprep.subr.mxu0 0.0
          %391 = vmatpush1.msra.mxu0 0.0
          %392 = vmatprep.subr.mxu0 0.0
          %393 = vmatpush1.msra.mxu0 0.0
          %394 = vmatprep.subr.mxu0 0.0
          %395 = vmatpush1.msra.mxu0 0.0
          %396 = vmatprep.subr.mxu0 0.0
          %397 = vmatpush1.msra.mxu0 0.0
          %398 = vmatprep.subr.mxu0 0.0
          %399 = vmatpush1.msra.mxu0 0.0
          %400 = vmatprep.subr.mxu0 0.0
          %401 = vmatpush1.msra.mxu0 0.0
          %402 = vmatprep.subr.mxu0 0.0
          %403 = vmatpush1.msra.mxu0 0.0
          %404 = vmatprep.subr.mxu0 0.0
          %405 = vmatpush1.msra.mxu0 0.0
          %406 = vmatprep.subr.mxu0 0.0
          %407 = vmatpush1.msra.mxu0 0.0
          %408 = vmatprep.subr.mxu0 0.0
          %409 = vmatpush1.msra.mxu0 0.0
          %410 = vmatprep.subr.mxu0 0.0
          %411 = vmatpush1.msra.mxu0 0.0
          %412 = vmatprep.subr.mxu0 0.0
          %413 = vmatpush1.msra.mxu0 0.0
          %414 = vmatprep.subr.mxu0 0.0
          %415 = vmatpush1.msra.mxu0 0.0
          %416 = vmatprep.subr.mxu0 0.0
          %417 = vmatpush1.msra.mxu0 0.0
          %418 = vmatprep.subr.mxu0 0.0
          %419 = vmatpush1.msra.mxu0 0.0
          %420 = vmatprep.subr.mxu0 0.0
          %421 = vmatpush1.msra.mxu0 0.0
          %422 = vmatprep.subr.mxu0 0.0
          %423 = vmatpush1.msra.mxu0 0.0
          %424 = vmatprep.subr.mxu0 0.0
          %425 = vmatpush1.msra.mxu0 0.0
          %426 = vmatprep.subr.mxu0 0.0
          %427 = vmatpush1.msra.mxu0 0.0
          %428 = vmatprep.subr.mxu0 0.0
          %429 = vmatpush1.msra.mxu0 0.0
          %430 = vmatprep.subr.mxu0 0.0
          %431 = vmatpush1.msra.mxu0 0.0
          %432 = vmatprep.subr.mxu0 0.0
          %433 = vmatpush1.msra.mxu0 0.0
          %434 = vmatprep.subr.mxu0 0.0
          %435 = vmatpush1.msra.mxu0 0.0
          %436 = vmatprep.subr.mxu0 0.0
          %437 = vmatpush1.msra.mxu0 0.0
          %438 = vmatprep.subr.mxu0 0.0
          %439 = vmatpush1.msra.mxu0 0.0
          %440 = vmatprep.subr.mxu0 0.0
          %441 = vmatpush1.msra.mxu0 0.0
          %442 = vmatprep.subr.mxu0 0.0
          %443 = vmatpush1.msra.mxu0 0.0
          %444 = vmatprep.subr.mxu0 0.0
          %445 = vmatpush1.msra.mxu0 0.0
          %446 = vmatprep.subr.mxu0 0.0
          %447 = vmatpush1.msra.mxu0 0.0
          %448 = vmatprep.mubr.f32.mxu0 0.0
          %449 = vmatmul.mubr.f32.gmra.mrb[0].mxu0 %v344
          %v450 = vpop.f32.mrb[0].mxu0
          %v451 = vadd.f32 %v283, %v450
          %v452 = vpop.f32.mrb[0].mxu0
          %v453 = vadd.f32 %v283, %v452
          %454 = vmatprep.mubr.f32.mxu0 0.0
          %455 = vmatmul.mubr.f32.gmra.mrb[0].mxu0 %v347
          %v456 = vpop.f32.mrb[0].mxu0
          %v457 = vadd.f32 %v288, %v456
          %v458 = vpop.f32.mrb[0].mxu0
          %v459 = vadd.f32 %v288, %v458
          %460 = vmatprep.mubr.f32.mxu0 0.0
          %461 = vmatmul.mubr.f32.gmra.mrb[0].mxu0 %v350
          %v462 = vpop.f32.mrb[0].mxu0
          %v463 = vadd.f32 %v293, %v462
          %v464 = vpop.f32.mrb[0].mxu0
          %v465 = vadd.f32 %v293, %v464
          %466 = vmatprep.mubr.f32.mxu0 0.0
          %467 = vmatmul.mubr.f32.gmra.mrb[0].mxu0 %v353
          %v468 = vpop.f32.mrb[0].mxu0
          %v469 = vadd.f32 %v298, %v468
          %v470 = vpop.f32.mrb[0].mxu0
          %v471 = vadd.f32 %v298, %v470
          %472 = vmatprep.mubr.f32.mxu0 0.0
          %473 = vmatmul.mubr.f32.gmra.mrb[0].mxu0 %v356
          %v474 = vpop.f32.mrb[0].mxu0
          %v475 = vadd.f32 %v303, %v474
          %v476 = vpop.f32.mrb[0].mxu0
          %v477 = vadd.f32 %v303, %v476
          %478 = vmatprep.mubr.f32.mxu0 0.0
          %479 = vmatmul.mubr.f32.gmra.mrb[0].mxu0 %v359
          %v480 = vpop.f32.mrb[0].mxu0
          %v481 = vadd.f32 %v308, %v480
          %v482 = vpop.f32.mrb[0].mxu0
          %v483 = vadd.f32 %v308, %v482
          %484 = vmatprep.mubr.f32.mxu0 0.0
          %485 = vmatmul.mubr.f32.gmra.mrb[0].mxu0 %v362
          %v486 = vpop.f32.mrb[0].mxu0
          %v487 = vadd.f32 %v313, %v486
          %v488 = vpop.f32.mrb[0].mxu0
          %v489 = vadd.f32 %v313, %v488
          %490 = vmatprep.mubr.f32.mxu0 0.0
          %491 = vmatmul.mubr.f32.gmra.mrb[0].mxu0 %v365
          %v492 = vpop.f32.mrb[0].mxu0
          %v493 = vadd.f32 %v318, %v492
          %v494 = vpop.f32.mrb[0].mxu0
          %v495 = vadd.f32 %v318, %v494
          %496 = vmatprep.mubr.f32.mxu0 0.0
          %497 = vmatmul.mubr.f32.gmra.mrb[0].mxu0 %v368
          %v498 = vpop.f32.mrb[0].mxu0
          %v499 = vadd.f32 %v323, %v498
          %v500 = vpop.f32.mrb[0].mxu0
          %v501 = vadd.f32 %v323, %v500
          %502 = vmatprep.mubr.f32.mxu0 0.0
          %503 = vmatmul.mubr.f32.gmra.mrb[0].mxu0 %v371
          %v504 = vpop.f32.mrb[0].mxu0
          %v505 = vadd.f32 %v328, %v504
          %v506 = vpop.f32.mrb[0].mxu0
          %v507 = vadd.f32 %v328, %v506
          %508 = vmatprep.mubr.f32.mxu0 0.0
          %509 = vmatmul.mubr.f32.gmra.mrb[0].mxu0 %v374
          %v510 = vpop.f32.mrb[0].mxu0
          %v511 = vadd.f32 %v333, %v510
          %v512 = vpop.f32.mrb[0].mxu0
          %v513 = vadd.f32 %v333, %v512
          %514 = vmatprep.mubr.f32.mxu0 0.0
          %515 = vmatmul.mubr.f32.gmra.mrb[0].mxu0 %v377
          %v516 = vpop.f32.mrb[0].mxu0
          %v517 = vadd.f32 %v338, %v516
          %v518 = vpop.f32.mrb[0].mxu0
          %v519 = vadd.f32 %v338, %v518
          %520 = vdwg.mxu0
          %v521 = vtanh.pop %v451
          %v522 = vtanh.pop %v453
          %v523 = vtanh.pop %v457
          %v524 = vtanh.pop %v459
          %v525 = vtanh.pop %v463
          %v526 = vtanh.pop %v465
          %v527 = vtanh.pop %v469
          %v528 = vtanh.pop %v471
          %v529 = vtanh.pop %v475
          %v530 = vtanh.pop %v477
          %v531 = vtanh.pop %v481
          %v532 = vtanh.pop %v483
          %v533 = vtanh.pop %v487
          %v534 = vtanh.pop %v489
          %v535 = vtanh.pop %v493
          %v536 = vtanh.pop %v495
          %v537 = vsub.f32 %v521, %v529
          %v538 = vsub.f32 %v522, %v530
          %v539 = vsub.f32 %v523, %v531
          %v540 = vsub.f32 %v524, %v532
          %v541 = vsub.f32 %v525, %v533
          %v542 = vsub.f32 %v526, %v534
          %v543 = vsub.f32 %v527, %v535
          %v544 = vsub.f32 %v528, %v536
          %v545 = vmul.f32 %v499, %v537
          %v546 = vmul.f32 %v501, %v538
          %v547 = vmul.f32 %v505, %v539
          %v548 = vmul.f32 %v507, %v540
          %v549 = vmul.f32 %v511, %v541
          %v550 = vmul.f32 %v513, %v542
          %v551 = vmul.f32 %v517, %v543
          %v552 = vmul.f32 %v519, %v544
          %v553 = vadd.f32 %v529, %v545
          %v554 = vadd.f32 %v530, %v546
          %v555 = vadd.f32 %v531, %v547
          %v556 = vadd.f32 %v532, %v548
          %v557 = vadd.f32 %v533, %v549
          %v558 = vadd.f32 %v534, %v550
          %v559 = vadd.f32 %v535, %v551
          %v560 = vadd.f32 %v536, %v552
          %562 = vset.pattern.permute.xlu0 0
          %563 = vperm.xlu0 %562, %v259
          %v564 = vpop.permute.xlu0 %563
          %567 = vset.pattern.permute.xlu0 0
          %568 = vperm.xlu0 %567, %v260
          %v569 = vpop.permute.xlu0 %568
          %572 = vset.pattern.permute.xlu0 0
          %573 = vperm.xlu0 %572, %v261
          %v574 = vpop.permute.xlu0 %573
          %577 = vset.pattern.permute.xlu0 0
          %578 = vperm.xlu0 %577, %v262
          %v579 = vpop.permute.xlu0 %578
          %vm581 = vcmask 261120
          %v583 = vsel %vm581, %v250, 0
          %v586 = vsel %vm581, %v251, 0
          %v589 = vsel %vm581, %v252, 0
          %v592 = vsel %vm581, %v253, 0
          %594 = vmatprep.subr.mxu0 %v554
          %595 = vmatpush1.msra.mxu0 %v553
          %596 = vmatprep.subr.mxu0 %v556
          %597 = vmatpush1.msra.mxu0 %v555
          %598 = vmatprep.subr.mxu0 %v558
          %599 = vmatpush1.msra.mxu0 %v557
          %600 = vmatprep.subr.mxu0 %v560
          %601 = vmatpush1.msra.mxu0 %v559
          %602 = vmatprep.subr.mxu0 0.0
          %603 = vmatpush1.msra.mxu0 0.0
          %604 = vmatprep.subr.mxu0 0.0
          %605 = vmatpush1.msra.mxu0 0.0
          %606 = vmatprep.subr.mxu0 0.0
          %607 = vmatpush1.msra.mxu0 0.0
          %608 = vmatprep.subr.mxu0 0.0
          %609 = vmatpush1.msra.mxu0 0.0
          %610 = vmatprep.subr.mxu0 0.0
          %611 = vmatpush1.msra.mxu0 0.0
          %612 = vmatprep.subr.mxu0 0.0
          %613 = vmatpush1.msra.mxu0 0.0
          %614 = vmatprep.subr.mxu0 0.0
          %615 = vmatpush1.msra.mxu0 0.0
          %616 = vmatprep.subr.mxu0 0.0
          %617 = vmatpush1.msra.mxu0 0.0
          %618 = vmatprep.subr.mxu0 0.0
          %619 = vmatpush1.msra.mxu0 0.0
          %620 = vmatprep.subr.mxu0 0.0
          %621 = vmatpush1.msra.mxu0 0.0
          %622 = vmatprep.subr.mxu0 0.0
          %623 = vmatpush1.msra.mxu0 0.0
          %624 = vmatprep.subr.mxu0 0.0
          %625 = vmatpush1.msra.mxu0 0.0
          %626 = vmatprep.subr.mxu0 0.0
          %627 = vmatpush1.msra.mxu0 0.0
          %628 = vmatprep.subr.mxu0 0.0
          %629 = vmatpush1.msra.mxu0 0.0
          %630 = vmatprep.subr.mxu0 0.0
          %631 = vmatpush1.msra.mxu0 0.0
          %632 = vmatprep.subr.mxu0 0.0
          %633 = vmatpush1.msra.mxu0 0.0
          %634 = vmatprep.subr.mxu0 0.0
          %635 = vmatpush1.msra.mxu0 0.0
          %636 = vmatprep.subr.mxu0 0.0
          %637 = vmatpush1.msra.mxu0 0.0
          %638 = vmatprep.subr.mxu0 0.0
          %639 = vmatpush1.msra.mxu0 0.0
          %640 = vmatprep.subr.mxu0 0.0
          %641 = vmatpush1.msra.mxu0 0.0
          %642 = vmatprep.subr.mxu0 0.0
          %643 = vmatpush1.msra.mxu0 0.0
          %644 = vmatprep.subr.mxu0 0.0
          %645 = vmatpush1.msra.mxu0 0.0
          %646 = vmatprep.subr.mxu0 0.0
          %647 = vmatpush1.msra.mxu0 0.0
          %648 = vmatprep.subr.mxu0 0.0
          %649 = vmatpush1.msra.mxu0 0.0
          %650 = vmatprep.subr.mxu0 0.0
          %651 = vmatpush1.msra.mxu0 0.0
          %652 = vmatprep.subr.mxu0 0.0
          %653 = vmatpush1.msra.mxu0 0.0
          %654 = vmatprep.subr.mxu0 0.0
          %655 = vmatpush1.msra.mxu0 0.0
          %656 = vmatprep.subr.mxu0 0.0
          %657 = vmatpush1.msra.mxu0 0.0
          %658 = vmatprep.mubr.f32.mxu0 0.0
          %659 = vmatmul.mubr.f32.gmra.mrb[0].mxu0 %v583
          %v660 = vpop.f32.mrb[0].mxu0
          %v661 = vadd.f32 %v564, %v660
          %v662 = vpop.f32.mrb[0].mxu0
          %v663 = vadd.f32 %v564, %v662
          %664 = vmatprep.mubr.f32.mxu0 0.0
          %665 = vmatmul.mubr.f32.gmra.mrb[0].mxu0 %v586
          %v666 = vpop.f32.mrb[0].mxu0
          %v667 = vadd.f32 %v569, %v666
          %v668 = vpop.f32.mrb[0].mxu0
          %v669 = vadd.f32 %v569, %v668
          %670 = vmatprep.mubr.f32.mxu0 0.0
          %671 = vmatmul.mubr.f32.gmra.mrb[0].mxu0 %v589
          %v672 = vpop.f32.mrb[0].mxu0
          %v673 = vadd.f32 %v574, %v672
          %v674 = vpop.f32.mrb[0].mxu0
          %v675 = vadd.f32 %v574, %v674
          %676 = vmatprep.mubr.f32.mxu0 0.0
          %677 = vmatmul.mubr.f32.gmra.mrb[0].mxu0 %v592
          %v678 = vpop.f32.mrb[0].mxu0
          %v679 = vadd.f32 %v579, %v678
          %v680 = vpop.f32.mrb[0].mxu0
          %v681 = vadd.f32 %v579, %v680
          %682 = vdwg.mxu0
          %v683 = vmul.f32 %v661, %v537
          %v684 = vmul.f32 %v663, %v538
          %v685 = vmul.f32 %v667, %v539
          %v686 = vmul.f32 %v669, %v540
          %v687 = vmul.f32 %v673, %v541
          %v688 = vmul.f32 %v675, %v542
          %v689 = vmul.f32 %v679, %v543
          %v690 = vmul.f32 %v681, %v544
          %v691 = vadd.f32 %v529, %v683
          %v692 = vadd.f32 %v530, %v684
          %v693 = vadd.f32 %v531, %v685
          %v694 = vadd.f32 %v532, %v686
          %v695 = vadd.f32 %v533, %v687
          %v696 = vadd.f32 %v534, %v688
          %v697 = vadd.f32 %v535, %v689
          %v698 = vadd.f32 %v536, %v690
          %700 = vset.pattern.permute.xlu0 0
          %701 = vperm.xlu0 %700, %v264
          %v702 = vpop.permute.xlu0 %701
          %705 = vset.pattern.permute.xlu0 0
          %706 = vperm.xlu0 %705, %v265
          %v707 = vpop.permute.xlu0 %706
          %710 = vset.pattern.permute.xlu0 0
          %711 = vperm.xlu0 %710, %v266
          %v712 = vpop.permute.xlu0 %711
          %715 = vset.pattern.permute.xlu0 0
          %716 = vperm.xlu0 %715, %v267
          %v717 = vpop.permute.xlu0 %716
          %v720 = vsel %vm581, %v255, 0
          %v723 = vsel %vm581, %v256, 0
          %v726 = vsel %vm581, %v257, 0
          %v729 = vsel %vm581, %v258, 0
          %731 = vmatprep.subr.mxu0 %v692
          %732 = vmatpush1.msra.mxu0 %v691
          %733 = vmatprep.subr.mxu0 %v694
          %734 = vmatpush1.msra.mxu0 %v693
          %735 = vmatprep.subr.mxu0 %v696
          %736 = vmatpush1.msra.mxu0 %v695
          %737 = vmatprep.subr.mxu0 %v698
          %738 = vmatpush1.msra.mxu0 %v697
          %739 = vmatprep.subr.mxu0 0.0
          %740 = vmatpush1.msra.mxu0 0.0
          %741 = vmatprep.subr.mxu0 0.0
          %742 = vmatpush1.msra.mxu0 0.0
          %743 = vmatprep.subr.mxu0 0.0
          %744 = vmatpush1.msra.mxu0 0.0
          %745 = vmatprep.subr.mxu0 0.0
          %746 = vmatpush1.msra.mxu0 0.0
          %747 = vmatprep.subr.mxu0 0.0
          %748 = vmatpush1.msra.mxu0 0.0
          %749 = vmatprep.subr.mxu0 0.0
          %750 = vmatpush1.msra.mxu0 0.0
          %751 = vmatprep.subr.mxu0 0.0
          %752 = vmatpush1.msra.mxu0 0.0
          %753 = vmatprep.subr.mxu0 0.0
          %754 = vmatpush1.msra.mxu0 0.0
          %755 = vmatprep.subr.mxu0 0.0
          %756 = vmatpush1.msra.mxu0 0.0
          %757 = vmatprep.subr.mxu0 0.0
          %758 = vmatpush1.msra.mxu0 0.0
          %759 = vmatprep.subr.mxu0 0.0
          %760 = vmatpush1.msra.mxu0 0.0
          %761 = vmatprep.subr.mxu0 0.0
          %762 = vmatpush1.msra.mxu0 0.0
          %763 = vmatprep.subr.mxu0 0.0
          %764 = vmatpush1.msra.mxu0 0.0
          %765 = vmatprep.subr.mxu0 0.0
          %766 = vmatpush1.msra.mxu0 0.0
          %767 = vmatprep.subr.mxu0 0.0
          %768 = vmatpush1.msra.mxu0 0.0
          %769 = vmatprep.subr.mxu0 0.0
          %770 = vmatpush1.msra.mxu0 0.0
          %771 = vmatprep.subr.mxu0 0.0
          %772 = vmatpush1.msra.mxu0 0.0
          %773 = vmatprep.subr.mxu0 0.0
          %774 = vmatpush1.msra.mxu0 0.0
          %775 = vmatprep.subr.mxu0 0.0
          %776 = vmatpush1.msra.mxu0 0.0
          %777 = vmatprep.subr.mxu0 0.0
          %778 = vmatpush1.msra.mxu0 0.0
          %779 = vmatprep.subr.mxu0 0.0
          %780 = vmatpush1.msra.mxu0 0.0
          %781 = vmatprep.subr.mxu0 0.0
          %782 = vmatpush1.msra.mxu0 0.0
          %783 = vmatprep.subr.mxu0 0.0
          %784 = vmatpush1.msra.mxu0 0.0
          %785 = vmatprep.subr.mxu0 0.0
          %786 = vmatpush1.msra.mxu0 0.0
          %787 = vmatprep.subr.mxu0 0.0
          %788 = vmatpush1.msra.mxu0 0.0
          %789 = vmatprep.subr.mxu0 0.0
          %790 = vmatpush1.msra.mxu0 0.0
          %791 = vmatprep.subr.mxu0 0.0
          %792 = vmatpush1.msra.mxu0 0.0
          %793 = vmatprep.subr.mxu0 0.0
          %794 = vmatpush1.msra.mxu0 0.0
          %795 = vmatprep.mubr.f32.mxu0 0.0
          %796 = vmatmul.mubr.f32.gmra.mrb[0].mxu0 %v720
          %v797 = vpop.f32.mrb[0].mxu0
          %v798 = vadd.f32 %v702, %v797
          %v799 = vpop.f32.mrb[0].mxu0
          %v800 = vadd.f32 %v702, %v799
          %801 = vmatprep.mubr.f32.mxu0 0.0
          %802 = vmatmul.mubr.f32.gmra.mrb[0].mxu0 %v723
          %v803 = vpop.f32.mrb[0].mxu0
          %v804 = vadd.f32 %v707, %v803
          %v805 = vpop.f32.mrb[0].mxu0
          %v806 = vadd.f32 %v707, %v805
          %807 = vmatprep.mubr.f32.mxu0 0.0
          %808 = vmatmul.mubr.f32.gmra.mrb[0].mxu0 %v726
          %v809 = vpop.f32.mrb[0].mxu0
          %v810 = vadd.f32 %v712, %v809
          %v811 = vpop.f32.mrb[0].mxu0
          %v812 = vadd.f32 %v712, %v811
          %813 = vmatprep.mubr.f32.mxu0 0.0
          %814 = vmatmul.mubr.f32.gmra.mrb[0].mxu0 %v729
          %v815 = vpop.f32.mrb[0].mxu0
          %v816 = vadd.f32 %v717, %v815
          %v817 = vpop.f32.mrb[0].mxu0
          %v818 = vadd.f32 %v717, %v817
          %819 = vdwg.mxu0
          %v820 = vmul.f32 %v798, %v537
          %v821 = vmul.f32 %v800, %v538
          %v822 = vmul.f32 %v804, %v539
          %v823 = vmul.f32 %v806, %v540
          %v824 = vmul.f32 %v810, %v541
          %v825 = vmul.f32 %v812, %v542
          %v826 = vmul.f32 %v816, %v543
          %v827 = vmul.f32 %v818, %v544
          %v828 = vadd.f32 %v529, %v820
          %v829 = vadd.f32 %v530, %v821
          %v830 = vadd.f32 %v531, %v822
          %v831 = vadd.f32 %v532, %v823
          %v832 = vadd.f32 %v533, %v824
          %v833 = vadd.f32 %v534, %v825
          %v834 = vadd.f32 %v535, %v826
          %v835 = vadd.f32 %v536, %v827
          %s836 = smul.addr %s275, 8
          %s837 = scalar_lea.vmem %s218, %s836 [#allocation2]
          %838 = vst [vmem:[%s837] sm:$0xff] %v828
          %839 = vst [vmem:[%s837 + $0x8] sm:$0xff] %v829
          %840 = vst [vmem:[%s837 + $0x20] sm:$0xff] %v830
          %841 = vst [vmem:[%s837 + $0x28] sm:$0xff] %v831
          %842 = vst [vmem:[%s837 + $0x40] sm:$0xff] %v832
          %843 = vst [vmem:[%s837 + $0x48] sm:$0xff] %v833
          %844 = vst [vmem:[%s837 + $0x60] sm:$0xff] %v834
          %845 = vst [vmem:[%s837 + $0x68] sm:$0xff] %v835
        $region45: #{improved_mlp_forward_t.1} parent=39 // loop_footer
          %s273 = sadd.s32 1, %s269
        $region46: #{improved_mlp_forward_t.1} parent=39 // loop_footer_branch
          %268 = sbr.rel target = $region42
        $region47: #{improved_mlp_forward_t.1} parent=39 // loop_exit
          _
        %s846 = sand.u32 %s137, 1
        %s847 = scalar_lea.sflag [#allocation3], %s846
        %s848 = sand.u32 %s137, 1
        %s849 = smul.addr %s848, 128
        %s850 = scalar_lea.vmem [#allocation2], %s849
        // Predicated region
        $region48: #{improved_mlp_forward_t.1} parent=39 // pred_check
          %p851 = pneg %p147
        $region49: #{improved_mlp_forward_t.1} parent=39 // pred_check_branch
          %853 = sbr.rel (%p851) target = $region51
        $region50: #{improved_mlp_forward_t.1} parent=39 // pred_region
          %s854 = smul.u32 4, %s19
          %s856 = ssub.s32 2048, 2048
          %857 = vsyncadd %s847, %s856
          %s858 = smul.addr %s854, 128
          %s859 = scalar_lea.hbm %s5, %s858
          %s860 = sshll.u32 %s850, 4
          %s861 = int_to_ptr.vmem [resolvable:$true] %s860
          %866 = dma.vmem_to_hbm [thread:$0]  %s861, 2048, %s859, %s847, 512, 2048, 32
        $region51: #{improved_mlp_forward_t.1} parent=39 // pred_fallthru
          _
      $region40: #{improved_mlp_forward_t.1} parent=5 // pred_fallthru
        _
      %p867 = scmp.le.s32.totalorder 2, %s14
      // Predicated region
      $region52: #{improved_mlp_forward_t.1} parent=5 // pred_check
        %p868 = pneg %p867
      $region53: #{improved_mlp_forward_t.1} parent=5 // pred_check_branch
        %870 = sbr.rel (%p868) target = $region55
      $region54: #{improved_mlp_forward_t.1} parent=5 // pred_region
        %s871 = ssub.s32 %s14, 2
        // Predicated region
        $region56: #{improved_mlp_forward_t.1} parent=54 // pred_check
          %p872 = pneg %p153
        $region57: #{improved_mlp_forward_t.1} parent=54 // pred_check_branch
          %874 = sbr.rel (%p872) target = $region59
        $region58: #{improved_mlp_forward_t.1} parent=54 // pred_region
          %s875 = sand.u32 %s138, 1
          %s876 = scalar_lea.sflag [#allocation3], %s875
          %s877 = sand.u32 %s138, 1
          %s878 = smul.addr %s877, 128
          %s879 = scalar_lea.vmem [#allocation2], %s878
          %880 = dma.done %s876, 2048
        $region59: #{improved_mlp_forward_t.1} parent=54 // pred_fallthru
          _
      $region55: #{improved_mlp_forward_t.1} parent=5 // pred_fallthru
        _
    $region6: #{improved_mlp_forward_t.1} parent=1 // loop_footer
      %s18 = sadd.s32 1, %s14
    $region7: #{improved_mlp_forward_t.1} parent=1 // loop_footer_branch
      %13 = sbr.rel target = $region3
    $region8: #{improved_mlp_forward_t.1} parent=1 // loop_exit
      _
    %881 = vsyncpa [#allocation3], 1
    %s882 = scalar_lea.sflag [#allocation3], 1
    %883 = vsyncpa %s882, 1

</llo_original>
